<compile_context>
chip_gen: v5e
topology: v5e:2x2
jax: 0.10.0
libtpu: 0.0.40
codegen_flags: <defaults>
</compile_context>

<pallas_src>
import functools
import math

import jax
import jax.numpy as jnp
import numpy as np
from jax.experimental import pallas as pl
from jax.experimental.pallas import tpu as pltpu


_CONTRACT_0 = (((0,), (0,)), ((), ()))  # A^T @ B : contract axis 0 of both operands


def _layer_norm_cm(x, gamma, beta, eps=1e-5):
    """Channel-major LayerNorm: normalize over the channel axis (axis 0 / sublanes)."""
    mu = jnp.mean(x, axis=0, keepdims=True)
    xc = x - mu
    var = jnp.mean(xc * xc, axis=0, keepdims=True)
    return xc * jax.lax.rsqrt(var + eps) * gamma + beta


# ---------------------------------------------------------------------------
# Pallas kernel: one invocation computes the whole forward pass.
# ---------------------------------------------------------------------------
def _cross_attention_kernel(xm_ref, w_ref, pb_ref, out_ref, *, C, F, B, L, S):
    BL, SB = B * L, B * S
    mc = BL + SB                      # start of the misc (per-channel vector) columns

    xm = xm_ref[...]                  # (C+1, BL+SB): [x | mem] channel-major + ones row

    # ---- fused Q|K|V projection over [x | mem]; in_proj bias rides the ones row ----
    win_t = w_ref[0:C + 1, 0:3 * C]                                   # (C+1, 3C)
    proj = jax.lax.dot_general(win_t, xm, _CONTRACT_0,
                               preferred_element_type=jnp.float32)    # (3C, BL+SB)

    # q already carries 1/sqrt(head_dim) (folded into Wq / qpos by the wrapper)
    q = proj[0:C, 0:BL] + pb_ref[0:C, 0:BL]                           # (C, BL)
    # rows 0:C of posbias at these columns hold Wk@pos2^T, rows C:2C are zeros,
    # so the k half gets its pos term and the v half gets +0.
    kv = proj[C:3 * C, BL:BL + SB] + pb_ref[0:2 * C, BL:BL + SB]      # (2C, SB)

    # ---- expand K|V once to the lane-batched layout (2C, S, B*L) ----
    kv_exp = jnp.concatenate(
        [jnp.broadcast_to(kv[:, b * S:(b + 1) * S][:, :, None], (2 * C, S, L))
         for b in range(B)],
        axis=2)                                                       # (2C, S, BL)
    k_exp = kv_exp[0:C]
    v_exp = kv_exp[C:2 * C]

    # ---- single full-128-lane softmax over the key axis (sublanes) ----
    # head_dim == 1 (channel == nhead): each channel is its own attention head.
    s = q[:, None, :] * k_exp                                         # (C, S, BL)
    m = jnp.max(s, axis=1, keepdims=True)
    e = jnp.exp(s - m)
    denom = jnp.sum(e, axis=1, keepdims=True)
    # approx=True would use the EUP vrcp slot, but keep exact for the 1e-4 check.
    p = e * pl.reciprocal(denom, approx=False)
    attn = jnp.sum(p * v_exp, axis=1)                                 # (C, BL)

    # ---- output projection (+ bo) ----
    wo_t = w_ref[0:C, 3 * C:4 * C]                                    # (C, C)
    bo = pb_ref[0:C, mc + 0:mc + 1]
    attn = jax.lax.dot_general(wo_t, attn, _CONTRACT_0,
                               preferred_element_type=jnp.float32) + bo

    # ---- residual + LayerNorm1 (dropout1 = identity in eval) ----
    x = xm[0:C, 0:BL]
    y = _layer_norm_cm(x + attn,
                       pb_ref[0:C, mc + 2:mc + 3], pb_ref[0:C, mc + 3:mc + 4])

    # ---- FFN: linear2(relu(linear1(y))); b1 rides the MXU via a ones row ----
    y_aug = jnp.concatenate([y, jnp.ones((1, BL), jnp.float32)], axis=0)   # (C+1, BL)
    w1_t = w_ref[0:C + 1, 4 * C:4 * C + F]                            # (C+1, F), row C = b1
    h1 = jnp.maximum(
        jax.lax.dot_general(w1_t, y_aug, _CONTRACT_0,
                            preferred_element_type=jnp.float32), 0.0)  # (F, BL)
    w2 = w_ref[0:C, 4 * C + F:4 * C + 2 * F]                          # (C, F)
    b2 = pb_ref[0:C, mc + 1:mc + 2]
    h2 = jnp.dot(w2, h1, preferred_element_type=jnp.float32) + b2      # (C, BL)

    # ---- residual + LayerNorm2; (C, B*L) = (8, 128) fully lane-dense store ----
    out_ref[...] = _layer_norm_cm(y + h2,
                                  pb_ref[0:C, mc + 4:mc + 5],
                                  pb_ref[0:C, mc + 5:mc + 6])


# ---------------------------------------------------------------------------
# Plain-JAX glue
# ---------------------------------------------------------------------------
def pos_embedding(H, W, row_embed, col_embed):
    """Matches CrossAttention.pos_embedding: returns (H*W, C), l = h*W + w."""
    half = col_embed.shape[1]
    x_emb = col_embed[:W]                                   # (W, C//2)
    y_emb = row_embed[:H]                                   # (H, C//2)
    pos = jnp.concatenate(
        [jnp.broadcast_to(x_emb[None, :, :], (H, W, half)),
         jnp.broadcast_to(y_emb[:, None, :], (H, W, half))],
        axis=-1)                                            # (H, W, C)
    return pos.reshape(H * W, 2 * half)


def _pack_params(params, pos1, pos2, B, C, L, S, F, scale):
    """Two cacheable parameter slabs (depend only on weights + spatial sizes)."""
    in_w, in_b = params["in_proj_weight"], params["in_proj_bias"]
    wq, wk, wv = in_w[:C], in_w[C:2 * C], in_w[2 * C:]
    bq, bk, bv = in_b[:C], in_b[C:2 * C], in_b[2 * C:]
    wo, bo = params["out_proj_weight"], params["out_proj_bias"]
    w1, b1 = params["linear1_weight"], params["linear1_bias"]    # (F, C), (F,)
    w2, b2 = params["linear2_weight"], params["linear2_bias"]    # (C, F), (C,)

    # Weight slab (C+1, 4C+2F): transposed (contraction on axis 0), lane-dense.
    # The extra row carries in_proj bias and b1 (bias-in-matmul trick).
    win_t = jnp.concatenate(
        [jnp.concatenate([wq.T * scale, wk.T, wv.T], axis=1),
         jnp.concatenate([bq * scale, bk, bv])[None, :]], axis=0)        # (C+1, 3C)
    wo_t = jnp.concatenate([wo.T, jnp.zeros((1, C), jnp.float32)], axis=0)   # (C+1, C)
    w1_t = jnp.concatenate([w1.T, b1[None, :]], axis=0)                  # (C+1, F)
    w2_p = jnp.concatenate([w2, jnp.zeros((1, F), jnp.float32)], axis=0)  # (C+1, F)
    wslab = jnp.concatenate([win_t, wo_t, w1_t, w2_p], axis=1)           # (C+1, 4C+2F)

    # Pos / misc slab (2C, B*L + B*S + 6): batch-invariant pos-embedding
    # projections (scale folded into the q part) + per-channel vectors as columns.
    qpos = jnp.broadcast_to(((wq @ pos1.T) * scale)[:, None, :],
                            (C, B, L)).reshape(C, B * L)
    kpos = jnp.broadcast_to((wk @ pos2.T)[:, None, :],
                            (C, B, S)).reshape(C, B * S)
    misc = jnp.stack([bo, b2,
                      params["norm1_weight"], params["norm1_bias"],
                      params["norm2_weight"], params["norm2_bias"]], axis=1)  # (C, 6)
    top = jnp.concatenate([qpos, kpos, misc], axis=1)                    # (C, BL+SB+6)
    posbias = jnp.concatenate([top, jnp.zeros_like(top)], axis=0)        # (2C, ...)
    return wslab, posbias


def cross_attention_pallas(search, template, params, nhead=8):
    B, C, H, W = search.shape
    _, _, Ht, Wt = template.shape
    L, S = H * W, Ht * Wt
    assert C % nhead == 0
    head_dim = C // nhead
    # TODO(synk): kernel is specialised to head_dim == 1 (channel=8, nhead=8, as in
    #             the module __init__); head_dim > 1 would need per-head contractions.
    assert head_dim == 1, "kernel specialised to head_dim == 1 (channel == nhead)"
    scale = 1.0 / math.sqrt(head_dim)
    F = params["linear1_weight"].shape[0]
    BL, SB = B * L, B * S

    pos1 = pos_embedding(H, W, params["row_embed"], params["col_embed"])    # (L, C)
    pos2 = pos_embedding(Ht, Wt, params["row_embed"], params["col_embed"])  # (S, C)

    # TODO(synk): wslab/posbias depend only on the weights and (H,W,Ht,Wt); hoist /
    #             cache them per parameter set when this layer is called in a loop.
    wslab, posbias = _pack_params(params, pos1, pos2, B, C, L, S, F, scale)

    # Activations: channel-major, batch-major token axis, plus a ones row for the
    # bias-in-matmul trick.  x_cm[c, b*L + l] = search[b, c, l].
    x_cm = search.reshape(B, C, L).transpose(1, 0, 2).reshape(C, BL)
    mem_cm = template.reshape(B, C, S).transpose(1, 0, 2).reshape(C, SB)
    xm = jnp.concatenate([x_cm, mem_cm], axis=1)                          # (C, BL+SB)
    xm_aug = jnp.concatenate([xm, jnp.ones((1, BL + SB), jnp.float32)], axis=0)

    out_cm = pl.pallas_call(
        functools.partial(_cross_attention_kernel, C=C, F=F, B=B, L=L, S=S),
        out_shape=jax.ShapeDtypeStruct((C, BL), jnp.float32),
        in_specs=[pl.BlockSpec(memory_space=pltpu.MemorySpace.VMEM)] * 3,
        out_specs=pl.BlockSpec(memory_space=pltpu.MemorySpace.VMEM),
    )(xm_aug, wslab, posbias)

    # (C, B*L) -> (B, C, L) -> (B, C, H, W)   (== x.permute(1,2,0).view(B,C,H,W))
    return out_cm.reshape(C, B, L).transpose(1, 0, 2).reshape(B, C, H, W)


# ---------------------------------------------------------------------------
# Pure-JAX reference (mirrors PyTorch semantics, incl. general multi-head path)
# ---------------------------------------------------------------------------
def reference_forward(search, template, params, nhead=8):
    B, C, H, W = search.shape
    _, _, Ht, Wt = template.shape
    L, S = H * W, Ht * Wt
    hd = C // nhead

    pos1 = pos_embedding(H, W, params["row_embed"], params["col_embed"])
    pos2 = pos_embedding(Ht, Wt, params["row_embed"], params["col_embed"])

    tgt = search.reshape(B, C, L).transpose(2, 0, 1)       # (L, B, C)
    mem = template.reshape(B, C, S).transpose(2, 0, 1)     # (S, B, C)
    q_in, k_in, v_in = tgt + pos1[:, None, :], mem + pos2[:, None, :], mem

    in_w, in_b = params["in_proj_weight"], params["in_proj_bias"]
    q = q_in @ in_w[:C].T + in_b[:C]
    k = k_in @ in_w[C:2 * C].T + in_b[C:2 * C]
    v = v_in @ in_w[2 * C:].T + in_b[2 * C:]

    def split_heads(x, T):
        return x.reshape(T, B * nhead, hd).transpose(1, 0, 2)

    qh, kh, vh = split_heads(q, L), split_heads(k, S), split_heads(v, S)
    scores = jnp.einsum("bld,bsd->bls", qh, kh) / math.sqrt(hd)
    p = jax.nn.softmax(scores, axis=-1)
    o = jnp.einsum("bls,bsd->bld", p, vh).transpose(1, 0, 2).reshape(L, B, C)
    attn = o @ params["out_proj_weight"].T + params["out_proj_bias"]

    def ln(x, g, b, eps=1e-5):
        mu = x.mean(-1, keepdims=True)
        var = ((x - mu) ** 2).mean(-1, keepdims=True)
        return (x - mu) / jnp.sqrt(var + eps) * g + b

    x = ln(tgt + attn, params["norm1_weight"], params["norm1_bias"])
    h1 = jax.nn.relu(x @ params["linear1_weight"].T + params["linear1_bias"])
    h2 = h1 @ params["linear2_weight"].T + params["linear2_bias"]
    x = ln(x + h2, params["norm2_weight"], params["norm2_bias"])
    return x.transpose(1, 2, 0).reshape(B, C, H, W)


# ---------------------------------------------------------------------------
# Deterministic parameter initialization (shapes from the module __init__)
# ---------------------------------------------------------------------------
def init_params(key, channel=8, dim_ff=64, num_embed=500):
    C = channel
    ks = jax.random.split(key, 10)

    def rn(k, shape, scl=0.1):
        return jax.random.normal(k, shape, jnp.float32) * scl

    return dict(
        in_proj_weight=rn(ks[0], (3 * C, C)),
        in_proj_bias=rn(ks[1], (3 * C,)),
        out_proj_weight=rn(ks[2], (C, C)),
        out_proj_bias=rn(ks[3], (C,)),
        linear1_weight=rn(ks[4], (dim_ff, C)),
        linear1_bias=rn(ks[5], (dim_ff,)),
        linear2_weight=rn(ks[6], (C, dim_ff)),
        linear2_bias=rn(ks[7], (C,)),
        norm1_weight=jnp.ones((C,), jnp.float32),
        norm1_bias=jnp.zeros((C,), jnp.float32),
        norm2_weight=jnp.ones((C,), jnp.float32),
        norm2_bias=jnp.zeros((C,), jnp.float32),
        row_embed=rn(ks[8], (num_embed, C // 2)),
        col_embed=rn(ks[9], (num_embed, C // 2)),
    )


if __name__ == "__main__":
    key = jax.random.PRNGKey(0)
    kp, ksr, ktp = jax.random.split(key, 3)

    params = init_params(kp, channel=8)
    search = jax.random.normal(ksr, (2, 8, 8, 8), jnp.float32)     # (B, C, H, W)
    template = jax.random.normal(ktp, (2, 8, 4, 4), jnp.float32)   # (B, C, Ht, Wt)

    fwd = jax.jit(cross_attention_pallas)
    out = jax.block_until_ready(fwd(search, template, params))

    ref = reference_forward(search, template, params)
    np.testing.assert_allclose(np.asarray(out), np.asarray(ref), rtol=1e-4, atol=1e-4)

    print("KERNEL_OK")
</pallas_src>

<mosaic_0001>
module attributes {stable_mosaic.version = 11 : i64} {
  func.func @_cross_attention_kernel(%arg0: memref<9x160xf32, #tpu.memory_space<vmem>>, %arg1: memref<9x160xf32, #tpu.memory_space<vmem>>, %arg2: memref<16x166xf32, #tpu.memory_space<vmem>>, %arg3: memref<8x128xf32, #tpu.memory_space<vmem>>) attributes {dimension_semantics = [], scalar_prefetch = 0 : i64, scratch_operands = 0 : i64, tpu.core_type = #tpu.core_type<tc>} {
    %c0 = arith.constant 0 : index
    %c0_0 = arith.constant 0 : index
    %0 = vector.load %arg0[%c0, %c0_0] : memref<9x160xf32, #tpu.memory_space<vmem>>, vector<9x160xf32>
    %c0_1 = arith.constant 0 : index
    %c0_2 = arith.constant 0 : index
    %1 = vector.load %arg1[%c0_1, %c0_2] : memref<9x160xf32, #tpu.memory_space<vmem>>, vector<9x24xf32>
    %cst = arith.constant dense<0.000000e+00> : vector<24x160xf32>
    %2 = tpu.matmul %1, %0, %cst {dimension_numbers = #tpu.dot_dimension_numbers<[0], [0], [1], [1], [0, 1, 1, 1], [], []>} : vector<9x24xf32>, vector<9x160xf32>, vector<24x160xf32> -> vector<24x160xf32>
    %3 = vector.extract_strided_slice %2 {offsets = [0, 0], sizes = [8, 128], strides = [1, 1]} : vector<24x160xf32> to vector<8x128xf32>
    %c0_3 = arith.constant 0 : index
    %c0_4 = arith.constant 0 : index
    %4 = vector.load %arg2[%c0_3, %c0_4] : memref<16x166xf32, #tpu.memory_space<vmem>>, vector<8x128xf32>
    %5 = arith.addf %3, %4 : vector<8x128xf32>
    %6 = vector.extract_strided_slice %2 {offsets = [8, 128], sizes = [16, 32], strides = [1, 1]} : vector<24x160xf32> to vector<16x32xf32>
    %c0_5 = arith.constant 0 : index
    %c128 = arith.constant 128 : index
    %7 = vector.load %arg2[%c0_5, %c128] : memref<16x166xf32, #tpu.memory_space<vmem>>, vector<16x32xf32>
    %8 = arith.addf %6, %7 : vector<16x32xf32>
    %9 = vector.extract_strided_slice %8 {offsets = [0, 0], sizes = [16, 16], strides = [1, 1]} : vector<16x32xf32> to vector<16x16xf32>
    %10 = vector.shape_cast %9 : vector<16x16xf32> to vector<16x16x1xf32>
    %11 = vector.shape_cast %10 : vector<16x16x1xf32> to vector<16x16x1xf32>
    %12 = vector.broadcast %11 : vector<16x16x1xf32> to vector<16x16x64xf32>
    %13 = vector.extract_strided_slice %8 {offsets = [0, 16], sizes = [16, 16], strides = [1, 1]} : vector<16x32xf32> to vector<16x16xf32>
    %14 = vector.shape_cast %13 : vector<16x16xf32> to vector<16x16x1xf32>
    %15 = vector.shape_cast %14 : vector<16x16x1xf32> to vector<16x16x1xf32>
    %16 = vector.broadcast %15 : vector<16x16x1xf32> to vector<16x16x64xf32>
    %17 = tpu.concatenate %12, %16 in 2 : vector<16x16x64xf32>, vector<16x16x64xf32> -> vector<16x16x128xf32>
    %18 = vector.extract_strided_slice %17 {offsets = [0, 0, 0], sizes = [8, 16, 128], strides = [1, 1, 1]} : vector<16x16x128xf32> to vector<8x16x128xf32>
    %19 = vector.extract_strided_slice %17 {offsets = [8, 0, 0], sizes = [8, 16, 128], strides = [1, 1, 1]} : vector<16x16x128xf32> to vector<8x16x128xf32>
    %20 = vector.shape_cast %5 : vector<8x128xf32> to vector<8x1x128xf32>
    %21 = vector.broadcast %20 : vector<8x1x128xf32> to vector<8x16x128xf32>
    %22 = arith.mulf %21, %18 : vector<8x16x128xf32>
    %cst_6 = arith.constant dense<0xFF800000> : vector<8x128xf32>
    %23 = vector.multi_reduction <maximumf>, %22, %cst_6 [1] : vector<8x16x128xf32> to vector<8x128xf32>
    %24 = vector.shape_cast %23 : vector<8x128xf32> to vector<8x1x128xf32>
    %25 = vector.broadcast %24 : vector<8x1x128xf32> to vector<8x16x128xf32>
    %26 = arith.subf %22, %25 : vector<8x16x128xf32>
    %27 = math.exp %26 : vector<8x16x128xf32>
    %cst_7 = arith.constant dense<0.000000e+00> : vector<8x128xf32>
    %28 = vector.multi_reduction <add>, %27, %cst_7 [1] : vector<8x16x128xf32> to vector<8x128xf32>
    %29 = vector.shape_cast %28 : vector<8x128xf32> to vector<8x1x128xf32>
    %30 = tpu.reciprocal %29 : vector<8x1x128xf32> -> vector<8x1x128xf32>
    %31 = vector.broadcast %30 : vector<8x1x128xf32> to vector<8x16x128xf32>
    %32 = arith.mulf %27, %31 : vector<8x16x128xf32>
    %33 = arith.mulf %32, %19 : vector<8x16x128xf32>
    %cst_8 = arith.constant dense<0.000000e+00> : vector<8x128xf32>
    %34 = vector.multi_reduction <add>, %33, %cst_8 [1] : vector<8x16x128xf32> to vector<8x128xf32>
    %c0_9 = arith.constant 0 : index
    %c24 = arith.constant 24 : index
    %35 = vector.load %arg1[%c0_9, %c24] : memref<9x160xf32, #tpu.memory_space<vmem>>, vector<8x8xf32>
    %c0_10 = arith.constant 0 : index
    %c160 = arith.constant 160 : index
    %36 = vector.load %arg2[%c0_10, %c160] : memref<16x166xf32, #tpu.memory_space<vmem>>, vector<8x1xf32>
    %cst_11 = arith.constant dense<0.000000e+00> : vector<8x128xf32>
    %37 = tpu.matmul %35, %34, %cst_11 {dimension_numbers = #tpu.dot_dimension_numbers<[0], [0], [1], [1], [0, 1, 1, 1], [], []>} : vector<8x8xf32>, vector<8x128xf32>, vector<8x128xf32> -> vector<8x128xf32>
    %38 = vector.broadcast %36 : vector<8x1xf32> to vector<8x128xf32>
    %39 = arith.addf %37, %38 : vector<8x128xf32>
    %40 = vector.extract_strided_slice %0 {offsets = [0, 0], sizes = [8, 128], strides = [1, 1]} : vector<9x160xf32> to vector<8x128xf32>
    %41 = arith.addf %40, %39 : vector<8x128xf32>
    %c0_12 = arith.constant 0 : index
    %c162 = arith.constant 162 : index
    %42 = vector.load %arg2[%c0_12, %c162] : memref<16x166xf32, #tpu.memory_space<vmem>>, vector<8x1xf32>
    %c0_13 = arith.constant 0 : index
    %c163 = arith.constant 163 : index
    %43 = vector.load %arg2[%c0_13, %c163] : memref<16x166xf32, #tpu.memory_space<vmem>>, vector<8x1xf32>
    %cst_14 = arith.constant dense<0.000000e+00> : vector<128xf32>
    %44 = vector.multi_reduction <add>, %41, %cst_14 [0] : vector<8x128xf32> to vector<128xf32>
    %45 = vector.shape_cast %44 : vector<128xf32> to vector<1x128xf32>
    %cst_15 = arith.constant 8.000000e+00 : f32
    %46 = vector.broadcast %cst_15 : f32 to vector<1x128xf32>
    %47 = arith.divf %45, %46 : vector<1x128xf32>
    %48 = vector.broadcast %47 : vector<1x128xf32> to vector<8x128xf32>
    %49 = arith.subf %41, %48 : vector<8x128xf32>
    %50 = arith.mulf %49, %49 : vector<8x128xf32>
    %cst_16 = arith.constant dense<0.000000e+00> : vector<128xf32>
    %51 = vector.multi_reduction <add>, %50, %cst_16 [0] : vector<8x128xf32> to vector<128xf32>
    %52 = vector.shape_cast %51 : vector<128xf32> to vector<1x128xf32>
    %cst_17 = arith.constant 8.000000e+00 : f32
    %53 = vector.broadcast %cst_17 : f32 to vector<1x128xf32>
    %54 = arith.divf %52, %53 : vector<1x128xf32>
    %cst_18 = arith.constant 9.99999974E-6 : f32
    %55 = vector.broadcast %cst_18 : f32 to vector<1x128xf32>
    %56 = arith.addf %54, %55 : vector<1x128xf32>
    %57 = math.rsqrt %56 : vector<1x128xf32>
    %58 = vector.broadcast %57 : vector<1x128xf32> to vector<8x128xf32>
    %59 = arith.mulf %49, %58 : vector<8x128xf32>
    %60 = vector.broadcast %42 : vector<8x1xf32> to vector<8x128xf32>
    %61 = arith.mulf %59, %60 : vector<8x128xf32>
    %62 = vector.broadcast %43 : vector<8x1xf32> to vector<8x128xf32>
    %63 = arith.addf %61, %62 : vector<8x128xf32>
    %cst_19 = arith.constant 1.000000e+00 : f32
    %64 = vector.broadcast %cst_19 : f32 to vector<1x128xf32>
    %65 = tpu.concatenate %63, %64 in 0 : vector<8x128xf32>, vector<1x128xf32> -> vector<9x128xf32>
    %c0_20 = arith.constant 0 : index
    %c32 = arith.constant 32 : index
    %66 = vector.load %arg1[%c0_20, %c32] : memref<9x160xf32, #tpu.memory_space<vmem>>, vector<9x64xf32>
    %cst_21 = arith.constant dense<0.000000e+00> : vector<64x128xf32>
    %67 = tpu.matmul %66, %65, %cst_21 {dimension_numbers = #tpu.dot_dimension_numbers<[0], [0], [1], [1], [0, 1, 1, 1], [], []>} : vector<9x64xf32>, vector<9x128xf32>, vector<64x128xf32> -> vector<64x128xf32>
    %cst_22 = arith.constant 0.000000e+00 : f32
    %68 = vector.broadcast %cst_22 : f32 to vector<64x128xf32>
    %69 = arith.maximumf %67, %68 : vector<64x128xf32>
    %c0_23 = arith.constant 0 : index
    %c96 = arith.constant 96 : index
    %70 = vector.load %arg1[%c0_23, %c96] : memref<9x160xf32, #tpu.memory_space<vmem>>, vector<8x64xf32>
    %c0_24 = arith.constant 0 : index
    %c161 = arith.constant 161 : index
    %71 = vector.load %arg2[%c0_24, %c161] : memref<16x166xf32, #tpu.memory_space<vmem>>, vector<8x1xf32>
    %cst_25 = arith.constant dense<0.000000e+00> : vector<8x128xf32>
    %72 = tpu.matmul %70, %69, %cst_25 {dimension_numbers = #tpu.dot_dimension_numbers<[1], [0], [0], [1], [0, 0, 1, 1], [], []>} : vector<8x64xf32>, vector<64x128xf32>, vector<8x128xf32> -> vector<8x128xf32>
    %73 = vector.broadcast %71 : vector<8x1xf32> to vector<8x128xf32>
    %74 = arith.addf %72, %73 : vector<8x128xf32>
    %75 = arith.addf %63, %74 : vector<8x128xf32>
    %c0_26 = arith.constant 0 : index
    %c164 = arith.constant 164 : index
    %76 = vector.load %arg2[%c0_26, %c164] : memref<16x166xf32, #tpu.memory_space<vmem>>, vector<8x1xf32>
    %c0_27 = arith.constant 0 : index
    %c165 = arith.constant 165 : index
    %77 = vector.load %arg2[%c0_27, %c165] : memref<16x166xf32, #tpu.memory_space<vmem>>, vector<8x1xf32>
    %cst_28 = arith.constant dense<0.000000e+00> : vector<128xf32>
    %78 = vector.multi_reduction <add>, %75, %cst_28 [0] : vector<8x128xf32> to vector<128xf32>
    %79 = vector.shape_cast %78 : vector<128xf32> to vector<1x128xf32>
    %cst_29 = arith.constant 8.000000e+00 : f32
    %80 = vector.broadcast %cst_29 : f32 to vector<1x128xf32>
    %81 = arith.divf %79, %80 : vector<1x128xf32>
    %82 = vector.broadcast %81 : vector<1x128xf32> to vector<8x128xf32>
    %83 = arith.subf %75, %82 : vector<8x128xf32>
    %84 = arith.mulf %83, %83 : vector<8x128xf32>
    %cst_30 = arith.constant dense<0.000000e+00> : vector<128xf32>
    %85 = vector.multi_reduction <add>, %84, %cst_30 [0] : vector<8x128xf32> to vector<128xf32>
    %86 = vector.shape_cast %85 : vector<128xf32> to vector<1x128xf32>
    %cst_31 = arith.constant 8.000000e+00 : f32
    %87 = vector.broadcast %cst_31 : f32 to vector<1x128xf32>
    %88 = arith.divf %86, %87 : vector<1x128xf32>
    %cst_32 = arith.constant 9.99999974E-6 : f32
    %89 = vector.broadcast %cst_32 : f32 to vector<1x128xf32>
    %90 = arith.addf %88, %89 : vector<1x128xf32>
    %91 = math.rsqrt %90 : vector<1x128xf32>
    %92 = vector.broadcast %91 : vector<1x128xf32> to vector<8x128xf32>
    %93 = arith.mulf %83, %92 : vector<8x128xf32>
    %94 = vector.broadcast %76 : vector<8x1xf32> to vector<8x128xf32>
    %95 = arith.mulf %93, %94 : vector<8x128xf32>
    %96 = vector.broadcast %77 : vector<8x1xf32> to vector<8x128xf32>
    %97 = arith.addf %95, %96 : vector<8x128xf32>
    %c0_33 = arith.constant 0 : index
    %c0_34 = arith.constant 0 : index
    %98 = vector.load %arg3[%c0_33, %c0_34] : memref<8x128xf32, #tpu.memory_space<vmem>>, vector<8x128xf32>
    tpu.vector_store %arg3[%c0_33, %c0_34], %97 {strides = array<i32>} : memref<8x128xf32, #tpu.memory_space<vmem>>, vector<8x128xf32>,
    return
  }
}

</mosaic_0001>

<llo_original>
// kernel: cross_attention_pallas.1
$region0: #{cross_attention_pallas.1}
  #allocation0 [shape = 'u32[]', space=smem, size = 0x4, offset = 0x4, fixed_abs, tag = 'smem constant byte address 0x4 - core index']
  #allocation1 [shape = 'u32[72,128]{1,0:T(1,128)}', space=vmem, size = 0x9000, scoped, tag = 'internal scratch']
  %s0 = inlined_call_operand.vmem [shape: f32[9,160], index: 0, kind: input, shape index: {}]
  %s1 = inlined_call_operand.vmem [shape: f32[9,160], index: 1, kind: input, shape index: {}]
  %s2 = inlined_call_operand.vmem [shape: f32[16,166], index: 2, kind: input, shape index: {}]
  %s3 = inlined_call_operand.vmem [shape: f32[8,128], index: 3, kind: output, shape index: {}]
  %s4 = sld [smem:[#allocation0]]
  $region22: #{cross_attention_pallas.1} parent=0
    _
  %s6 = ssub.s32 1, %s4
  %s7 = scalar_select 0, %s6, %s4
  // Predicated region
  $region2: #{cross_attention_pallas.1} parent=0 // pred_check
    _
  $region3: #{cross_attention_pallas.1} parent=0 // pred_check_branch
    %9 = sbr.rel (0) target = $region5
  $region4: #{cross_attention_pallas.1} parent=0 // pred_region
    _
  $region5: #{cross_attention_pallas.1} parent=0 // pred_fallthru
    _
  // Predicated region
  $region6: #{cross_attention_pallas.1} parent=0 // pred_check
    _
  $region7: #{cross_attention_pallas.1} parent=0 // pred_check_branch
    %11 = sbr.rel (0) target = $region9
  $region8: #{cross_attention_pallas.1} parent=0 // pred_region
    _
  $region9: #{cross_attention_pallas.1} parent=0 // pred_fallthru
    _
  // Predicated region
  $region10: #{cross_attention_pallas.1} parent=0 // pred_check
    _
  $region11: #{cross_attention_pallas.1} parent=0 // pred_check_branch
    %13 = sbr.rel (0) target = $region13
  $region12: #{cross_attention_pallas.1} parent=0 // pred_region
    _
  $region13: #{cross_attention_pallas.1} parent=0 // pred_fallthru
    _
  %v14 = vld [vmem:[%s0] sm:$0xff]
  %v15 = vld [vmem:[%s0 + $0x8] sm:$0xff]
  %v16 = vld [vmem:[%s0 + $0x10] sm:$0x1]
  %v17 = vld [vmem:[%s0 + $0x18] sm:$0x1]
  %v18 = vld [vmem:[%s1] sm:$0xff]
  %v19 = vld [vmem:[%s1 + $0x10] sm:$0x1]
  %20 = vxpose.xlu0.b32.start [1/16] %v18, 128
  %21 = vxpose.xlu0.b32.cont [2/16] %v19, 128
  %22 = vxpose.xlu0.b32.cont [3/16] 0.0, 128
  %23 = vxpose.xlu0.b32.cont [4/16] 0.0, 128
  %24 = vxpose.xlu0.b32.cont [5/16] 0.0, 128
  %25 = vxpose.xlu0.b32.cont [6/16] 0.0, 128
  %26 = vxpose.xlu0.b32.cont [7/16] 0.0, 128
  %27 = vxpose.xlu0.b32.cont [8/16] 0.0, 128
  %28 = vxpose.xlu0.b32.cont [9/16] 0.0, 128
  %29 = vxpose.xlu0.b32.cont [10/16] 0.0, 128
  %30 = vxpose.xlu0.b32.cont [11/16] 0.0, 128
  %31 = vxpose.xlu0.b32.cont [12/16] 0.0, 128
  %32 = vxpose.xlu0.b32.cont [13/16] 0.0, 128
  %33 = vxpose.xlu0.b32.cont [14/16] 0.0, 128
  %34 = vxpose.xlu0.b32.cont [15/16] 0.0, 128
  %35 = vxpose.xlu0.b32.end [16/16] 0.0, 128
  %v36 = vpop.trf.xlu0
  %v37 = vpop.trf.xlu0
  %v38 = vpop.trf.xlu0
  %v39 = vpop.trf.xlu0
  %v40 = vpop.trf.xlu0
  %v41 = vpop.trf.xlu0
  %v42 = vpop.trf.xlu0
  %v43 = vpop.trf.xlu0
  %v44 = vpop.trf.xlu0
  %v45 = vpop.trf.xlu0
  %v46 = vpop.trf.xlu0
  %v47 = vpop.trf.xlu0
  %v48 = vpop.trf.xlu0
  %v49 = vpop.trf.xlu0
  %v50 = vpop.trf.xlu0
  %v51 = vpop.trf.xlu0
  %vm52 = vcmask 72704
  %v54 = vsel %vm52, %v36, 0
  %v57 = vsel %vm52, %v37, 0
  %v60 = vsel %vm52, %v38, 0
  %vm62 = vcmask 1040384
  %v64 = vsel %vm62, %v16, 0
  %v67 = vsel %vm62, %v17, 0
  %69 = vmatpush.msra.mxu0 0.0
  %70 = vmatpush.msra.mxu0 0.0
  %71 = vmatpush.msra.mxu0 0.0
  %72 = vmatpush.msra.mxu0 0.0
  %73 = vmatpush.msra.mxu0 0.0
  %74 = vmatpush.msra.mxu0 0.0
  %75 = vmatpush.msra.mxu0 0.0
  %76 = vmatpush.msra.mxu0 0.0
  %77 = vmatpush.msra.mxu0 0.0
  %78 = vmatpush.msra.mxu0 0.0
  %79 = vmatpush.msra.mxu0 0.0
  %80 = vmatpush.msra.mxu0 0.0
  %81 = vmatpush.msra.mxu0 0.0
  %82 = vmatpush.msra.mxu0 0.0
  %83 = vmatpush.msra.mxu0 %v64
  %84 = vmatpush.msra.mxu0 %v14
  %85 = vmatmul.f32.gmra.mxu0 %v54
  %v86 = vpop.f32.mrf.mxu0
  %v87 = vadd.f32 0.0, %v86
  %88 = vmatmul.f32.gmra.mxu0 %v57
  %v89 = vpop.f32.mrf.mxu0
  %90 = vmatmul.f32.gmra.mxu0 %v60
  %v91 = vpop.f32.mrf.mxu0
  %92 = vdwg.mxu0
  %93 = vmatpush.msra.mxu0 0.0
  %94 = vmatpush.msra.mxu0 0.0
  %95 = vmatpush.msra.mxu0 0.0
  %96 = vmatpush.msra.mxu0 0.0
  %97 = vmatpush.msra.mxu0 0.0
  %98 = vmatpush.msra.mxu0 0.0
  %99 = vmatpush.msra.mxu0 0.0
  %100 = vmatpush.msra.mxu0 0.0
  %101 = vmatpush.msra.mxu0 0.0
  %102 = vmatpush.msra.mxu0 0.0
  %103 = vmatpush.msra.mxu0 0.0
  %104 = vmatpush.msra.mxu0 0.0
  %105 = vmatpush.msra.mxu0 0.0
  %106 = vmatpush.msra.mxu0 0.0
  %107 = vmatpush.msra.mxu0 %v67
  %108 = vmatpush.msra.mxu0 %v15
  %109 = vmatmul.f32.gmra.mxu0 %v54
  %v110 = vpop.f32.mrf.mxu0
  %111 = vmatmul.f32.gmra.mxu0 %v57
  %v112 = vpop.f32.mrf.mxu0
  %v113 = vadd.f32 0.0, %v112
  %114 = vmatmul.f32.gmra.mxu0 %v60
  %v115 = vpop.f32.mrf.mxu0
  %v116 = vadd.f32 0.0, %v115
  %117 = vdwg.mxu0
  %v118 = vld [vmem:[%s2] sm:$0xff]
  %v119 = vadd.f32 %v87, %v118
  %v120 = vld [vmem:[%s2 + $0x8] sm:$0xff]
  %v121 = vld [vmem:[%s2 + $0x18] sm:$0xff]
  %v122 = vadd.f32 %v113, %v120
  %v123 = vadd.f32 %v116, %v121
  %v124 = vperm.slane %v122, 0
  %v125 = vlaneseq
  %v126 = vshrl.u32 %v125, 7
  %128 = vset.pattern.permute.xlu0 %v126
  %129 = vperm.xlu0 %128, %v124
  %v130 = vpop.permute.xlu0 %129
  %v131 = vlaneseq
  %v132 = vshrl.u32 %v131, 7
  %v133 = vadd.s32 %v132, 8
  %134 = vset.pattern.permute.xlu0 %v133
  %135 = vperm.xlu0 %134, %v124
  %v136 = vpop.permute.xlu0 %135
  %v137 = vperm.slane %v122, 1
  %v138 = vlaneseq
  %v139 = vshrl.u32 %v138, 7
  %141 = vset.pattern.permute.xlu0 %v139
  %142 = vperm.xlu0 %141, %v137
  %v143 = vpop.permute.xlu0 %142
  %v144 = vlaneseq
  %v145 = vshrl.u32 %v144, 7
  %v146 = vadd.s32 %v145, 8
  %147 = vset.pattern.permute.xlu0 %v146
  %148 = vperm.xlu0 %147, %v137
  %v149 = vpop.permute.xlu0 %148
  %v150 = vperm.slane %v122, 2
  %v151 = vlaneseq
  %v152 = vshrl.u32 %v151, 7
  %154 = vset.pattern.permute.xlu0 %v152
  %155 = vperm.xlu0 %154, %v150
  %v156 = vpop.permute.xlu0 %155
  %v157 = vlaneseq
  %v158 = vshrl.u32 %v157, 7
  %v159 = vadd.s32 %v158, 8
  %160 = vset.pattern.permute.xlu0 %v159
  %161 = vperm.xlu0 %160, %v150
  %v162 = vpop.permute.xlu0 %161
  %v163 = vperm.slane %v122, 3
  %v164 = vlaneseq
  %v165 = vshrl.u32 %v164, 7
  %167 = vset.pattern.permute.xlu0 %v165
  %168 = vperm.xlu0 %167, %v163
  %v169 = vpop.permute.xlu0 %168
  %v170 = vlaneseq
  %v171 = vshrl.u32 %v170, 7
  %v172 = vadd.s32 %v171, 8
  %173 = vset.pattern.permute.xlu0 %v172
  %174 = vperm.xlu0 %173, %v163
  %v175 = vpop.permute.xlu0 %174
  %v176 = vperm.slane %v122, 4
  %v177 = vlaneseq
  %v178 = vshrl.u32 %v177, 7
  %180 = vset.pattern.permute.xlu0 %v178
  %181 = vperm.xlu0 %180, %v176
  %v182 = vpop.permute.xlu0 %181
  %v183 = vlaneseq
  %v184 = vshrl.u32 %v183, 7
  %v185 = vadd.s32 %v184, 8
  %186 = vset.pattern.permute.xlu0 %v185
  %187 = vperm.xlu0 %186, %v176
  %v188 = vpop.permute.xlu0 %187
  %v189 = vperm.slane %v122, 5
  %v190 = vlaneseq
  %v191 = vshrl.u32 %v190, 7
  %193 = vset.pattern.permute.xlu0 %v191
  %194 = vperm.xlu0 %193, %v189
  %v195 = vpop.permute.xlu0 %194
  %v196 = vlaneseq
  %v197 = vshrl.u32 %v196, 7
  %v198 = vadd.s32 %v197, 8
  %199 = vset.pattern.permute.xlu0 %v198
  %200 = vperm.xlu0 %199, %v189
  %v201 = vpop.permute.xlu0 %200
  %v202 = vperm.slane %v122, 6
  %v203 = vlaneseq
  %v204 = vshrl.u32 %v203, 7
  %206 = vset.pattern.permute.xlu0 %v204
  %207 = vperm.xlu0 %206, %v202
  %v208 = vpop.permute.xlu0 %207
  %v209 = vlaneseq
  %v210 = vshrl.u32 %v209, 7
  %v211 = vadd.s32 %v210, 8
  %212 = vset.pattern.permute.xlu0 %v211
  %213 = vperm.xlu0 %212, %v202
  %v214 = vpop.permute.xlu0 %213
  %v215 = vperm.slane %v122, 7
  %v216 = vlaneseq
  %v217 = vshrl.u32 %v216, 7
  %219 = vset.pattern.permute.xlu0 %v217
  %220 = vperm.xlu0 %219, %v215
  %v221 = vpop.permute.xlu0 %220
  %v222 = vlaneseq
  %v223 = vshrl.u32 %v222, 7
  %v224 = vadd.s32 %v223, 8
  %225 = vset.pattern.permute.xlu0 %v224
  %226 = vperm.xlu0 %225, %v215
  %v227 = vpop.permute.xlu0 %226
  %v228 = vperm.slane %v123, 0
  %v229 = vlaneseq
  %v230 = vshrl.u32 %v229, 7
  %232 = vset.pattern.permute.xlu0 %v230
  %233 = vperm.xlu0 %232, %v228
  %v234 = vpop.permute.xlu0 %233
  %v235 = vlaneseq
  %v236 = vshrl.u32 %v235, 7
  %v237 = vadd.s32 %v236, 8
  %238 = vset.pattern.permute.xlu0 %v237
  %239 = vperm.xlu0 %238, %v228
  %v240 = vpop.permute.xlu0 %239
  %v241 = vperm.slane %v123, 1
  %v242 = vlaneseq
  %v243 = vshrl.u32 %v242, 7
  %245 = vset.pattern.permute.xlu0 %v243
  %246 = vperm.xlu0 %245, %v241
  %v247 = vpop.permute.xlu0 %246
  %v248 = vlaneseq
  %v249 = vshrl.u32 %v248, 7
  %v250 = vadd.s32 %v249, 8
  %251 = vset.pattern.permute.xlu0 %v250
  %252 = vperm.xlu0 %251, %v241
  %v253 = vpop.permute.xlu0 %252
  %v254 = vperm.slane %v123, 2
  %v255 = vlaneseq
  %v256 = vshrl.u32 %v255, 7
  %258 = vset.pattern.permute.xlu0 %v256
  %259 = vperm.xlu0 %258, %v254
  %v260 = vpop.permute.xlu0 %259
  %v261 = vlaneseq
  %v262 = vshrl.u32 %v261, 7
  %v263 = vadd.s32 %v262, 8
  %264 = vset.pattern.permute.xlu0 %v263
  %265 = vperm.xlu0 %264, %v254
  %v266 = vpop.permute.xlu0 %265
  %v267 = vperm.slane %v123, 3
  %v268 = vlaneseq
  %v269 = vshrl.u32 %v268, 7
  %271 = vset.pattern.permute.xlu0 %v269
  %272 = vperm.xlu0 %271, %v267
  %v273 = vpop.permute.xlu0 %272
  %v274 = vlaneseq
  %v275 = vshrl.u32 %v274, 7
  %v276 = vadd.s32 %v275, 8
  %277 = vset.pattern.permute.xlu0 %v276
  %278 = vperm.xlu0 %277, %v267
  %v279 = vpop.permute.xlu0 %278
  %v280 = vperm.slane %v123, 4
  %v281 = vlaneseq
  %v282 = vshrl.u32 %v281, 7
  %284 = vset.pattern.permute.xlu0 %v282
  %285 = vperm.xlu0 %284, %v280
  %v286 = vpop.permute.xlu0 %285
  %v287 = vlaneseq
  %v288 = vshrl.u32 %v287, 7
  %v289 = vadd.s32 %v288, 8
  %290 = vset.pattern.permute.xlu0 %v289
  %291 = vperm.xlu0 %290, %v280
  %v292 = vpop.permute.xlu0 %291
  %v293 = vperm.slane %v123, 5
  %v294 = vlaneseq
  %v295 = vshrl.u32 %v294, 7
  %297 = vset.pattern.permute.xlu0 %v295
  %298 = vperm.xlu0 %297, %v293
  %v299 = vpop.permute.xlu0 %298
  %v300 = vlaneseq
  %v301 = vshrl.u32 %v300, 7
  %v302 = vadd.s32 %v301, 8
  %303 = vset.pattern.permute.xlu0 %v302
  %304 = vperm.xlu0 %303, %v293
  %v305 = vpop.permute.xlu0 %304
  %v306 = vperm.slane %v123, 6
  %v307 = vlaneseq
  %v308 = vshrl.u32 %v307, 7
  %310 = vset.pattern.permute.xlu0 %v308
  %311 = vperm.xlu0 %310, %v306
  %v312 = vpop.permute.xlu0 %311
  %v313 = vlaneseq
  %v314 = vshrl.u32 %v313, 7
  %v315 = vadd.s32 %v314, 8
  %316 = vset.pattern.permute.xlu0 %v315
  %317 = vperm.xlu0 %316, %v306
  %v318 = vpop.permute.xlu0 %317
  %v319 = vperm.slane %v123, 7
  %v320 = vlaneseq
  %v321 = vshrl.u32 %v320, 7
  %323 = vset.pattern.permute.xlu0 %v321
  %324 = vperm.xlu0 %323, %v319
  %v325 = vpop.permute.xlu0 %324
  %v326 = vlaneseq
  %v327 = vshrl.u32 %v326, 7
  %v328 = vadd.s32 %v327, 8
  %329 = vset.pattern.permute.xlu0 %v328
  %330 = vperm.xlu0 %329, %v319
  %v331 = vpop.permute.xlu0 %330
  %v332 = vlaneseq
  %v333 = vshrl.u32 %v332, 7
  %v334 = vadd.s32 %v333, 16
  %335 = vset.pattern.permute.xlu0 %v334
  %336 = vperm.xlu0 %335, %v124
  %v337 = vpop.permute.xlu0 %336
  %v338 = vlaneseq
  %v339 = vshrl.u32 %v338, 7
  %v340 = vadd.s32 %v339, 24
  %341 = vset.pattern.permute.xlu0 %v340
  %342 = vperm.xlu0 %341, %v124
  %v343 = vpop.permute.xlu0 %342
  %v344 = vlaneseq
  %v345 = vshrl.u32 %v344, 7
  %v346 = vadd.s32 %v345, 16
  %347 = vset.pattern.permute.xlu0 %v346
  %348 = vperm.xlu0 %347, %v137
  %v349 = vpop.permute.xlu0 %348
  %v350 = vlaneseq
  %v351 = vshrl.u32 %v350, 7
  %v352 = vadd.s32 %v351, 24
  %353 = vset.pattern.permute.xlu0 %v352
  %354 = vperm.xlu0 %353, %v137
  %v355 = vpop.permute.xlu0 %354
  %v356 = vlaneseq
  %v357 = vshrl.u32 %v356, 7
  %v358 = vadd.s32 %v357, 16
  %359 = vset.pattern.permute.xlu0 %v358
  %360 = vperm.xlu0 %359, %v150
  %v361 = vpop.permute.xlu0 %360
  %v362 = vlaneseq
  %v363 = vshrl.u32 %v362, 7
  %v364 = vadd.s32 %v363, 24
  %365 = vset.pattern.permute.xlu0 %v364
  %366 = vperm.xlu0 %365, %v150
  %v367 = vpop.permute.xlu0 %366
  %v368 = vlaneseq
  %v369 = vshrl.u32 %v368, 7
  %v370 = vadd.s32 %v369, 16
  %371 = vset.pattern.permute.xlu0 %v370
  %372 = vperm.xlu0 %371, %v163
  %v373 = vpop.permute.xlu0 %372
  %v374 = vlaneseq
  %v375 = vshrl.u32 %v374, 7
  %v376 = vadd.s32 %v375, 24
  %377 = vset.pattern.permute.xlu0 %v376
  %378 = vperm.xlu0 %377, %v163
  %v379 = vpop.permute.xlu0 %378
  %v380 = vlaneseq
  %v381 = vshrl.u32 %v380, 7
  %v382 = vadd.s32 %v381, 16
  %383 = vset.pattern.permute.xlu0 %v382
  %384 = vperm.xlu0 %383, %v176
  %v385 = vpop.permute.xlu0 %384
  %v386 = vlaneseq
  %v387 = vshrl.u32 %v386, 7
  %v388 = vadd.s32 %v387, 24
  %389 = vset.pattern.permute.xlu0 %v388
  %390 = vperm.xlu0 %389, %v176
  %v391 = vpop.permute.xlu0 %390
  %v392 = vlaneseq
  %v393 = vshrl.u32 %v392, 7
  %v394 = vadd.s32 %v393, 16
  %395 = vset.pattern.permute.xlu0 %v394
  %396 = vperm.xlu0 %395, %v189
  %v397 = vpop.permute.xlu0 %396
  %v398 = vlaneseq
  %v399 = vshrl.u32 %v398, 7
  %v400 = vadd.s32 %v399, 24
  %401 = vset.pattern.permute.xlu0 %v400
  %402 = vperm.xlu0 %401, %v189
  %v403 = vpop.permute.xlu0 %402
  %v404 = vlaneseq
  %v405 = vshrl.u32 %v404, 7
  %v406 = vadd.s32 %v405, 16
  %407 = vset.pattern.permute.xlu0 %v406
  %408 = vperm.xlu0 %407, %v202
  %v409 = vpop.permute.xlu0 %408
  %v410 = vlaneseq
  %v411 = vshrl.u32 %v410, 7
  %v412 = vadd.s32 %v411, 24
  %413 = vset.pattern.permute.xlu0 %v412
  %414 = vperm.xlu0 %413, %v202
  %v415 = vpop.permute.xlu0 %414
  %v416 = vlaneseq
  %v417 = vshrl.u32 %v416, 7
  %v418 = vadd.s32 %v417, 16
  %419 = vset.pattern.permute.xlu0 %v418
  %420 = vperm.xlu0 %419, %v215
  %v421 = vpop.permute.xlu0 %420
  %v422 = vlaneseq
  %v423 = vshrl.u32 %v422, 7
  %v424 = vadd.s32 %v423, 24
  %425 = vset.pattern.permute.xlu0 %v424
  %426 = vperm.xlu0 %425, %v215
  %v427 = vpop.permute.xlu0 %426
  %v428 = vlaneseq
  %v429 = vshrl.u32 %v428, 7
  %v430 = vadd.s32 %v429, 16
  %431 = vset.pattern.permute.xlu0 %v430
  %432 = vperm.xlu0 %431, %v228
  %v433 = vpop.permute.xlu0 %432
  %v434 = vlaneseq
  %v435 = vshrl.u32 %v434, 7
  %v436 = vadd.s32 %v435, 24
  %437 = vset.pattern.permute.xlu0 %v436
  %438 = vperm.xlu0 %437, %v228
  %v439 = vpop.permute.xlu0 %438
  %v440 = vlaneseq
  %v441 = vshrl.u32 %v440, 7
  %v442 = vadd.s32 %v441, 16
  %443 = vset.pattern.permute.xlu0 %v442
  %444 = vperm.xlu0 %443, %v241
  %v445 = vpop.permute.xlu0 %444
  %v446 = vlaneseq
  %v447 = vshrl.u32 %v446, 7
  %v448 = vadd.s32 %v447, 24
  %449 = vset.pattern.permute.xlu0 %v448
  %450 = vperm.xlu0 %449, %v241
  %v451 = vpop.permute.xlu0 %450
  %v452 = vlaneseq
  %v453 = vshrl.u32 %v452, 7
  %v454 = vadd.s32 %v453, 16
  %455 = vset.pattern.permute.xlu0 %v454
  %456 = vperm.xlu0 %455, %v254
  %v457 = vpop.permute.xlu0 %456
  %v458 = vlaneseq
  %v459 = vshrl.u32 %v458, 7
  %v460 = vadd.s32 %v459, 24
  %461 = vset.pattern.permute.xlu0 %v460
  %462 = vperm.xlu0 %461, %v254
  %v463 = vpop.permute.xlu0 %462
  %v464 = vlaneseq
  %v465 = vshrl.u32 %v464, 7
  %v466 = vadd.s32 %v465, 16
  %467 = vset.pattern.permute.xlu0 %v466
  %468 = vperm.xlu0 %467, %v267
  %v469 = vpop.permute.xlu0 %468
  %v470 = vlaneseq
  %v471 = vshrl.u32 %v470, 7
  %v472 = vadd.s32 %v471, 24
  %473 = vset.pattern.permute.xlu0 %v472
  %474 = vperm.xlu0 %473, %v267
  %v475 = vpop.permute.xlu0 %474
  %v476 = vlaneseq
  %v477 = vshrl.u32 %v476, 7
  %v478 = vadd.s32 %v477, 16
  %479 = vset.pattern.permute.xlu0 %v478
  %480 = vperm.xlu0 %479, %v280
  %v481 = vpop.permute.xlu0 %480
  %v482 = vlaneseq
  %v483 = vshrl.u32 %v482, 7
  %v484 = vadd.s32 %v483, 24
  %485 = vset.pattern.permute.xlu0 %v484
  %486 = vperm.xlu0 %485, %v280
  %v487 = vpop.permute.xlu0 %486
  %v488 = vlaneseq
  %v489 = vshrl.u32 %v488, 7
  %v490 = vadd.s32 %v489, 16
  %491 = vset.pattern.permute.xlu0 %v490
  %492 = vperm.xlu0 %491, %v293
  %v493 = vpop.permute.xlu0 %492
  %v494 = vlaneseq
  %v495 = vshrl.u32 %v494, 7
  %v496 = vadd.s32 %v495, 24
  %497 = vset.pattern.permute.xlu0 %v496
  %498 = vperm.xlu0 %497, %v293
  %v499 = vpop.permute.xlu0 %498
  %v500 = vlaneseq
  %v501 = vshrl.u32 %v500, 7
  %v502 = vadd.s32 %v501, 16
  %503 = vset.pattern.permute.xlu0 %v502
  %504 = vperm.xlu0 %503, %v306
  %v505 = vpop.permute.xlu0 %504
  %v506 = vlaneseq
  %v507 = vshrl.u32 %v506, 7
  %v508 = vadd.s32 %v507, 24
  %509 = vset.pattern.permute.xlu0 %v508
  %510 = vperm.xlu0 %509, %v306
  %v511 = vpop.permute.xlu0 %510
  %v512 = vlaneseq
  %v513 = vshrl.u32 %v512, 7
  %v514 = vadd.s32 %v513, 16
  %515 = vset.pattern.permute.xlu0 %v514
  %516 = vperm.xlu0 %515, %v319
  %v517 = vpop.permute.xlu0 %516
  %v518 = vlaneseq
  %v519 = vshrl.u32 %v518, 7
  %v520 = vadd.s32 %v519, 24
  %521 = vset.pattern.permute.xlu0 %v520
  %522 = vperm.xlu0 %521, %v319
  %v523 = vpop.permute.xlu0 %522
  %vm524 = vcmask 523264
  %v525 = vsel %vm524, %v130, %v337
  %v526 = vsel %vm524, %v136, %v343
  %v527 = vsel %vm524, %v143, %v349
  %v528 = vsel %vm524, %v149, %v355
  %v529 = vsel %vm524, %v156, %v361
  %v530 = vsel %vm524, %v162, %v367
  %v531 = vsel %vm524, %v169, %v373
  %v532 = vsel %vm524, %v175, %v379
  %v533 = vsel %vm524, %v182, %v385
  %v534 = vsel %vm524, %v188, %v391
  %v535 = vsel %vm524, %v195, %v397
  %v536 = vsel %vm524, %v201, %v403
  %v537 = vsel %vm524, %v208, %v409
  %v538 = vsel %vm524, %v214, %v415
  %v539 = vsel %vm524, %v221, %v421
  %v540 = vsel %vm524, %v227, %v427
  %v541 = vsel %vm524, %v234, %v433
  %v542 = vsel %vm524, %v240, %v439
  %v543 = vsel %vm524, %v247, %v445
  %v544 = vsel %vm524, %v253, %v451
  %v545 = vsel %vm524, %v260, %v457
  %v546 = vsel %vm524, %v266, %v463
  %v547 = vsel %vm524, %v273, %v469
  %v548 = vsel %vm524, %v279, %v475
  %v549 = vsel %vm524, %v286, %v481
  %v550 = vsel %vm524, %v292, %v487
  %v551 = vsel %vm524, %v299, %v493
  %v552 = vsel %vm524, %v305, %v499
  %v553 = vsel %vm524, %v312, %v505
  %v554 = vsel %vm524, %v318, %v511
  %v555 = vsel %vm524, %v325, %v517
  %v556 = vsel %vm524, %v331, %v523
  %v558 = vrot.slane %v119, 1
  %v559 = vrot.slane %v119, 2
  %v560 = vrot.slane %v119, 3
  %v561 = vrot.slane %v119, 4
  %v562 = vrot.slane %v119, 5
  %v563 = vrot.slane %v119, 6
  %v564 = vrot.slane %v119, 7
  %v565 = vperm.slane %v119, 0
  %v566 = vperm.slane %v558, 0
  %v567 = vperm.slane %v559, 0
  %v568 = vperm.slane %v560, 0
  %v569 = vperm.slane %v561, 0
  %v570 = vperm.slane %v562, 0
  %v571 = vperm.slane %v563, 0
  %v572 = vperm.slane %v564, 0
  %v581 = vmul.f32 %v565, %v525
  %v582 = vmul.f32 %v565, %v526
  %v583 = vmul.f32 %v566, %v527
  %v584 = vmul.f32 %v566, %v528
  %v585 = vmul.f32 %v567, %v529
  %v586 = vmul.f32 %v567, %v530
  %v587 = vmul.f32 %v568, %v531
  %v588 = vmul.f32 %v568, %v532
  %v589 = vmul.f32 %v569, %v533
  %v590 = vmul.f32 %v569, %v534
  %v591 = vmul.f32 %v570, %v535
  %v592 = vmul.f32 %v570, %v536
  %v593 = vmul.f32 %v571, %v537
  %v594 = vmul.f32 %v571, %v538
  %v595 = vmul.f32 %v572, %v539
  %v596 = vmul.f32 %v572, %v540
  %v597 = vmax.f32 %v581, %v582
  %v598 = vrot.slane %v597, 4
  %v599 = vmax.f32 %v597, %v598
  %v600 = vrot.slane %v599, 2
  %v601 = vmax.f32 %v599, %v600
  %v602 = vrot.slane %v601, 1
  %v603 = vmax.f32 %v601, %v602
  %v604 = vmax.f32 %v583, %v584
  %v605 = vrot.slane %v604, 4
  %v606 = vmax.f32 %v604, %v605
  %v607 = vrot.slane %v606, 2
  %v608 = vmax.f32 %v606, %v607
  %v609 = vrot.slane %v608, 1
  %v610 = vmax.f32 %v608, %v609
  %v611 = vmax.f32 %v585, %v586
  %v612 = vrot.slane %v611, 4
  %v613 = vmax.f32 %v611, %v612
  %v614 = vrot.slane %v613, 2
  %v615 = vmax.f32 %v613, %v614
  %v616 = vrot.slane %v615, 1
  %v617 = vmax.f32 %v615, %v616
  %v618 = vmax.f32 %v587, %v588
  %v619 = vrot.slane %v618, 4
  %v620 = vmax.f32 %v618, %v619
  %v621 = vrot.slane %v620, 2
  %v622 = vmax.f32 %v620, %v621
  %v623 = vrot.slane %v622, 1
  %v624 = vmax.f32 %v622, %v623
  %v625 = vmax.f32 %v589, %v590
  %v626 = vrot.slane %v625, 4
  %v627 = vmax.f32 %v625, %v626
  %v628 = vrot.slane %v627, 2
  %v629 = vmax.f32 %v627, %v628
  %v630 = vrot.slane %v629, 1
  %v631 = vmax.f32 %v629, %v630
  %v632 = vmax.f32 %v591, %v592
  %v633 = vrot.slane %v632, 4
  %v634 = vmax.f32 %v632, %v633
  %v635 = vrot.slane %v634, 2
  %v636 = vmax.f32 %v634, %v635
  %v637 = vrot.slane %v636, 1
  %v638 = vmax.f32 %v636, %v637
  %v639 = vmax.f32 %v593, %v594
  %v640 = vrot.slane %v639, 4
  %v641 = vmax.f32 %v639, %v640
  %v642 = vrot.slane %v641, 2
  %v643 = vmax.f32 %v641, %v642
  %v644 = vrot.slane %v643, 1
  %v645 = vmax.f32 %v643, %v644
  %v646 = vmax.f32 %v595, %v596
  %v647 = vrot.slane %v646, 4
  %v648 = vmax.f32 %v646, %v647
  %v649 = vrot.slane %v648, 2
  %v650 = vmax.f32 %v648, %v649
  %v651 = vrot.slane %v650, 1
  %v652 = vmax.f32 %v650, %v651
  %v653 = vsub.f32 %v581, %v603
  %v654 = vsub.f32 %v582, %v603
  %v655 = vsub.f32 %v583, %v610
  %v656 = vsub.f32 %v584, %v610
  %v657 = vsub.f32 %v585, %v617
  %v658 = vsub.f32 %v586, %v617
  %v659 = vsub.f32 %v587, %v624
  %v660 = vsub.f32 %v588, %v624
  %v661 = vsub.f32 %v589, %v631
  %v662 = vsub.f32 %v590, %v631
  %v663 = vsub.f32 %v591, %v638
  %v664 = vsub.f32 %v592, %v638
  %v665 = vsub.f32 %v593, %v645
  %v666 = vsub.f32 %v594, %v645
  %v667 = vsub.f32 %v595, %v652
  %v668 = vsub.f32 %v596, %v652
  %v669 = vmul.f32 %v653, 1.442695
  %v670 = vpow.pop %v669
  %v671 = vmul.f32 %v654, 1.442695
  %v672 = vpow.pop %v671
  %v673 = vmul.f32 %v655, 1.442695
  %v674 = vpow.pop %v673
  %v675 = vmul.f32 %v656, 1.442695
  %v676 = vpow.pop %v675
  %v677 = vmul.f32 %v657, 1.442695
  %v678 = vpow.pop %v677
  %v679 = vmul.f32 %v658, 1.442695
  %v680 = vpow.pop %v679
  %v681 = vmul.f32 %v659, 1.442695
  %v682 = vpow.pop %v681
  %v683 = vmul.f32 %v660, 1.442695
  %v684 = vpow.pop %v683
  %v685 = vmul.f32 %v661, 1.442695
  %v686 = vpow.pop %v685
  %v687 = vmul.f32 %v662, 1.442695
  %v688 = vpow.pop %v687
  %v689 = vmul.f32 %v663, 1.442695
  %v690 = vpow.pop %v689
  %v691 = vmul.f32 %v664, 1.442695
  %v692 = vpow.pop %v691
  %v693 = vmul.f32 %v665, 1.442695
  %v694 = vpow.pop %v693
  %v695 = vmul.f32 %v666, 1.442695
  %v696 = vpow.pop %v695
  %v697 = vmul.f32 %v667, 1.442695
  %v698 = vpow.pop %v697
  %v699 = vmul.f32 %v668, 1.442695
  %v700 = vpow.pop %v699
  %v701 = vadd.f32 %v670, %v672
  %v702 = vrot.slane %v701, 4
  %v703 = vadd.f32 %v701, %v702
  %v704 = vrot.slane %v703, 2
  %v705 = vadd.f32 %v703, %v704
  %v706 = vrot.slane %v705, 1
  %v707 = vadd.f32 %v705, %v706
  %v708 = vadd.f32 %v674, %v676
  %v709 = vrot.slane %v708, 4
  %v710 = vadd.f32 %v708, %v709
  %v711 = vrot.slane %v710, 2
  %v712 = vadd.f32 %v710, %v711
  %v713 = vrot.slane %v712, 1
  %v714 = vadd.f32 %v712, %v713
  %v715 = vadd.f32 %v678, %v680
  %v716 = vrot.slane %v715, 4
  %v717 = vadd.f32 %v715, %v716
  %v718 = vrot.slane %v717, 2
  %v719 = vadd.f32 %v717, %v718
  %v720 = vrot.slane %v719, 1
  %v721 = vadd.f32 %v719, %v720
  %v722 = vadd.f32 %v682, %v684
  %v723 = vrot.slane %v722, 4
  %v724 = vadd.f32 %v722, %v723
  %v725 = vrot.slane %v724, 2
  %v726 = vadd.f32 %v724, %v725
  %v727 = vrot.slane %v726, 1
  %v728 = vadd.f32 %v726, %v727
  %v729 = vadd.f32 %v686, %v688
  %v730 = vrot.slane %v729, 4
  %v731 = vadd.f32 %v729, %v730
  %v732 = vrot.slane %v731, 2
  %v733 = vadd.f32 %v731, %v732
  %v734 = vrot.slane %v733, 1
  %v735 = vadd.f32 %v733, %v734
  %v736 = vadd.f32 %v690, %v692
  %v737 = vrot.slane %v736, 4
  %v738 = vadd.f32 %v736, %v737
  %v739 = vrot.slane %v738, 2
  %v740 = vadd.f32 %v738, %v739
  %v741 = vrot.slane %v740, 1
  %v742 = vadd.f32 %v740, %v741
  %v743 = vadd.f32 %v694, %v696
  %v744 = vrot.slane %v743, 4
  %v745 = vadd.f32 %v743, %v744
  %v746 = vrot.slane %v745, 2
  %v747 = vadd.f32 %v745, %v746
  %v748 = vrot.slane %v747, 1
  %v749 = vadd.f32 %v747, %v748
  %v750 = vadd.f32 %v698, %v700
  %v751 = vrot.slane %v750, 4
  %v752 = vadd.f32 %v750, %v751
  %v753 = vrot.slane %v752, 2
  %v754 = vadd.f32 %v752, %v753
  %v755 = vrot.slane %v754, 1
  %v756 = vadd.f32 %v754, %v755
  %v757 = vrcp.pop %v707
  %v758 = vmul.f32 %v707, %v757
  %v759 = vsub.f32 1.0, %v758
  %v760 = vmul.f32 %v757, %v759
  %v761 = vadd.f32 %v757, %v760
  %vm762 = vweird.f32 %v707
  %vm763 = vweird.f32 %v757
  %vm764 = vmor %vm762, %vm763
  %v765 = vsel %vm764, %v757, %v761
  %v766 = vand.u32 2147483647, %v707
  %vm767 = vcmp.eq.f32.partialorder %v766, 8.507059e+37
  %v768 = vand.u32 %v707, 2147483648
  %v769 = vor.u32 1.1754944e-38, %v768
  %v770 = vsel %vm767, %v769, %v765
  %v771 = vrcp.pop %v714
  %v772 = vmul.f32 %v714, %v771
  %v773 = vsub.f32 1.0, %v772
  %v774 = vmul.f32 %v771, %v773
  %v775 = vadd.f32 %v771, %v774
  %vm776 = vweird.f32 %v714
  %vm777 = vweird.f32 %v771
  %vm778 = vmor %vm776, %vm777
  %v779 = vsel %vm778, %v771, %v775
  %v780 = vand.u32 2147483647, %v714
  %vm781 = vcmp.eq.f32.partialorder %v780, 8.507059e+37
  %v782 = vand.u32 %v714, 2147483648
  %v783 = vor.u32 1.1754944e-38, %v782
  %v784 = vsel %vm781, %v783, %v779
  %v785 = vrcp.pop %v721
  %v786 = vmul.f32 %v721, %v785
  %v787 = vsub.f32 1.0, %v786
  %v788 = vmul.f32 %v785, %v787
  %v789 = vadd.f32 %v785, %v788
  %vm790 = vweird.f32 %v721
  %vm791 = vweird.f32 %v785
  %vm792 = vmor %vm790, %vm791
  %v793 = vsel %vm792, %v785, %v789
  %v794 = vand.u32 2147483647, %v721
  %vm795 = vcmp.eq.f32.partialorder %v794, 8.507059e+37
  %v796 = vand.u32 %v721, 2147483648
  %v797 = vor.u32 1.1754944e-38, %v796
  %v798 = vsel %vm795, %v797, %v793
  %v799 = vrcp.pop %v728
  %v800 = vmul.f32 %v728, %v799
  %v801 = vsub.f32 1.0, %v800
  %v802 = vmul.f32 %v799, %v801
  %v803 = vadd.f32 %v799, %v802
  %vm804 = vweird.f32 %v728
  %vm805 = vweird.f32 %v799
  %vm806 = vmor %vm804, %vm805
  %v807 = vsel %vm806, %v799, %v803
  %v808 = vand.u32 2147483647, %v728
  %vm809 = vcmp.eq.f32.partialorder %v808, 8.507059e+37
  %v810 = vand.u32 %v728, 2147483648
  %v811 = vor.u32 1.1754944e-38, %v810
  %v812 = vsel %vm809, %v811, %v807
  %v813 = vrcp.pop %v735
  %v814 = vmul.f32 %v735, %v813
  %v815 = vsub.f32 1.0, %v814
  %v816 = vmul.f32 %v813, %v815
  %v817 = vadd.f32 %v813, %v816
  %vm818 = vweird.f32 %v735
  %vm819 = vweird.f32 %v813
  %vm820 = vmor %vm818, %vm819
  %v821 = vsel %vm820, %v813, %v817
  %v822 = vand.u32 2147483647, %v735
  %vm823 = vcmp.eq.f32.partialorder %v822, 8.507059e+37
  %v824 = vand.u32 %v735, 2147483648
  %v825 = vor.u32 1.1754944e-38, %v824
  %v826 = vsel %vm823, %v825, %v821
  %v827 = vrcp.pop %v742
  %v828 = vmul.f32 %v742, %v827
  %v829 = vsub.f32 1.0, %v828
  %v830 = vmul.f32 %v827, %v829
  %v831 = vadd.f32 %v827, %v830
  %vm832 = vweird.f32 %v742
  %vm833 = vweird.f32 %v827
  %vm834 = vmor %vm832, %vm833
  %v835 = vsel %vm834, %v827, %v831
  %v836 = vand.u32 2147483647, %v742
  %vm837 = vcmp.eq.f32.partialorder %v836, 8.507059e+37
  %v838 = vand.u32 %v742, 2147483648
  %v839 = vor.u32 1.1754944e-38, %v838
  %v840 = vsel %vm837, %v839, %v835
  %v841 = vrcp.pop %v749
  %v842 = vmul.f32 %v749, %v841
  %v843 = vsub.f32 1.0, %v842
  %v844 = vmul.f32 %v841, %v843
  %v845 = vadd.f32 %v841, %v844
  %vm846 = vweird.f32 %v749
  %vm847 = vweird.f32 %v841
  %vm848 = vmor %vm846, %vm847
  %v849 = vsel %vm848, %v841, %v845
  %v850 = vand.u32 2147483647, %v749
  %vm851 = vcmp.eq.f32.partialorder %v850, 8.507059e+37
  %v852 = vand.u32 %v749, 2147483648
  %v853 = vor.u32 1.1754944e-38, %v852
  %v854 = vsel %vm851, %v853, %v849
  %v855 = vrcp.pop %v756
  %v856 = vmul.f32 %v756, %v855
  %v857 = vsub.f32 1.0, %v856
  %v858 = vmul.f32 %v855, %v857
  %v859 = vadd.f32 %v855, %v858
  %vm860 = vweird.f32 %v756
  %vm861 = vweird.f32 %v855
  %vm862 = vmor %vm860, %vm861
  %v863 = vsel %vm862, %v855, %v859
  %v864 = vand.u32 2147483647, %v756
  %vm865 = vcmp.eq.f32.partialorder %v864, 8.507059e+37
  %v866 = vand.u32 %v756, 2147483648
  %v867 = vor.u32 1.1754944e-38, %v866
  %v868 = vsel %vm865, %v867, %v863
  %v869 = vmul.f32 %v670, %v770
  %v870 = vmul.f32 %v672, %v770
  %v871 = vmul.f32 %v674, %v784
  %v872 = vmul.f32 %v676, %v784
  %v873 = vmul.f32 %v678, %v798
  %v874 = vmul.f32 %v680, %v798
  %v875 = vmul.f32 %v682, %v812
  %v876 = vmul.f32 %v684, %v812
  %v877 = vmul.f32 %v686, %v826
  %v878 = vmul.f32 %v688, %v826
  %v879 = vmul.f32 %v690, %v840
  %v880 = vmul.f32 %v692, %v840
  %v881 = vmul.f32 %v694, %v854
  %v882 = vmul.f32 %v696, %v854
  %v883 = vmul.f32 %v698, %v868
  %v884 = vmul.f32 %v700, %v868
  %v885 = vmul.f32 %v869, %v541
  %v886 = vmul.f32 %v870, %v542
  %v887 = vmul.f32 %v871, %v543
  %v888 = vmul.f32 %v872, %v544
  %v889 = vmul.f32 %v873, %v545
  %v890 = vmul.f32 %v874, %v546
  %v891 = vmul.f32 %v875, %v547
  %v892 = vmul.f32 %v876, %v548
  %v893 = vmul.f32 %v877, %v549
  %v894 = vmul.f32 %v878, %v550
  %v895 = vmul.f32 %v879, %v551
  %v896 = vmul.f32 %v880, %v552
  %v897 = vmul.f32 %v881, %v553
  %v898 = vmul.f32 %v882, %v554
  %v899 = vmul.f32 %v883, %v555
  %v900 = vmul.f32 %v884, %v556
  %v901 = vadd.f32 %v885, %v886
  %v902 = vrot.slane %v901, 4
  %v903 = vadd.f32 %v901, %v902
  %v904 = vrot.slane %v903, 2
  %v905 = vadd.f32 %v903, %v904
  %v906 = vrot.slane %v905, 1
  %v907 = vadd.f32 %v905, %v906
  %v908 = vadd.f32 %v887, %v888
  %v909 = vrot.slane %v908, 4
  %v910 = vadd.f32 %v908, %v909
  %v911 = vrot.slane %v910, 2
  %v912 = vadd.f32 %v910, %v911
  %v913 = vrot.slane %v912, 1
  %v914 = vadd.f32 %v912, %v913
  %v915 = vadd.f32 %v889, %v890
  %v916 = vrot.slane %v915, 4
  %v917 = vadd.f32 %v915, %v916
  %v918 = vrot.slane %v917, 2
  %v919 = vadd.f32 %v917, %v918
  %v920 = vrot.slane %v919, 1
  %v921 = vadd.f32 %v919, %v920
  %v922 = vadd.f32 %v891, %v892
  %v923 = vrot.slane %v922, 4
  %v924 = vadd.f32 %v922, %v923
  %v925 = vrot.slane %v924, 2
  %v926 = vadd.f32 %v924, %v925
  %v927 = vrot.slane %v926, 1
  %v928 = vadd.f32 %v926, %v927
  %v929 = vadd.f32 %v893, %v894
  %v930 = vrot.slane %v929, 4
  %v931 = vadd.f32 %v929, %v930
  %v932 = vrot.slane %v931, 2
  %v933 = vadd.f32 %v931, %v932
  %v934 = vrot.slane %v933, 1
  %v935 = vadd.f32 %v933, %v934
  %v936 = vadd.f32 %v895, %v896
  %v937 = vrot.slane %v936, 4
  %v938 = vadd.f32 %v936, %v937
  %v939 = vrot.slane %v938, 2
  %v940 = vadd.f32 %v938, %v939
  %v941 = vrot.slane %v940, 1
  %v942 = vadd.f32 %v940, %v941
  %v943 = vadd.f32 %v897, %v898
  %v944 = vrot.slane %v943, 4
  %v945 = vadd.f32 %v943, %v944
  %v946 = vrot.slane %v945, 2
  %v947 = vadd.f32 %v945, %v946
  %v948 = vrot.slane %v947, 1
  %v949 = vadd.f32 %v947, %v948
  %v950 = vadd.f32 %v899, %v900
  %v951 = vrot.slane %v950, 4
  %v952 = vadd.f32 %v950, %v951
  %v953 = vrot.slane %v952, 2
  %v954 = vadd.f32 %v952, %v953
  %v955 = vrot.slane %v954, 1
  %v956 = vadd.f32 %v954, %v955
  %v957 = vld [vmem:[%s1] sm:$0xff]
  %v958 = vld [vmem:[%s2 + $0x8] sm:$0xff]
  %960 = vset.pattern.permute.xlu0 32
  %961 = vperm.xlu0 %960, %v958
  %v962 = vpop.permute.xlu0 %961
  %965 = vrot.lane.b32.xlu0 %v957, 104
  %v966 = vpop.permute.xlu0 %965
  %968 = vxpose.xlu0.b32.start [1/16] %v966, 128
  %969 = vxpose.xlu0.b32.cont [2/16] 0.0, 128
  %970 = vxpose.xlu0.b32.cont [3/16] 0.0, 128
  %971 = vxpose.xlu0.b32.cont [4/16] 0.0, 128
  %972 = vxpose.xlu0.b32.cont [5/16] 0.0, 128
  %973 = vxpose.xlu0.b32.cont [6/16] 0.0, 128
  %974 = vxpose.xlu0.b32.cont [7/16] 0.0, 128
  %975 = vxpose.xlu0.b32.cont [8/16] 0.0, 128
  %976 = vxpose.xlu0.b32.cont [9/16] 0.0, 128
  %977 = vxpose.xlu0.b32.cont [10/16] 0.0, 128
  %978 = vxpose.xlu0.b32.cont [11/16] 0.0, 128
  %979 = vxpose.xlu0.b32.cont [12/16] 0.0, 128
  %980 = vxpose.xlu0.b32.cont [13/16] 0.0, 128
  %981 = vxpose.xlu0.b32.cont [14/16] 0.0, 128
  %982 = vxpose.xlu0.b32.cont [15/16] 0.0, 128
  %983 = vxpose.xlu0.b32.end [16/16] 0.0, 128
  %v984 = vpop.trf.xlu0
  %v985 = vpop.trf.xlu0
  %v986 = vpop.trf.xlu0
  %v987 = vpop.trf.xlu0
  %v988 = vpop.trf.xlu0
  %v989 = vpop.trf.xlu0
  %v990 = vpop.trf.xlu0
  %v991 = vpop.trf.xlu0
  %v992 = vpop.trf.xlu0
  %v993 = vpop.trf.xlu0
  %v994 = vpop.trf.xlu0
  %v995 = vpop.trf.xlu0
  %v996 = vpop.trf.xlu0
  %v997 = vpop.trf.xlu0
  %v998 = vpop.trf.xlu0
  %v999 = vpop.trf.xlu0
  %vm1008 = vcmask 1041409
  %v1009 = vsel %vm1008, %v914, %v907
  %vm1010 = vcmask 1042434
  %v1011 = vsel %vm1010, %v921, %v1009
  %vm1012 = vcmask 1043459
  %v1013 = vsel %vm1012, %v928, %v1011
  %vm1014 = vcmask 1044484
  %v1015 = vsel %vm1014, %v935, %v1013
  %vm1016 = vcmask 1045509
  %v1017 = vsel %vm1016, %v942, %v1015
  %vm1018 = vcmask 1046534
  %v1019 = vsel %vm1018, %v949, %v1017
  %vm1020 = vcmask 1047559
  %v1021 = vsel %vm1020, %v956, %v1019
  %vm1023 = vcmask 64512
  %v1025 = vsel %vm1023, %v984, 0
  %1027 = vmatpush.msra.mxu0 0.0
  %1028 = vmatpush.msra.mxu0 0.0
  %1029 = vmatpush.msra.mxu0 0.0
  %1030 = vmatpush.msra.mxu0 0.0
  %1031 = vmatpush.msra.mxu0 0.0
  %1032 = vmatpush.msra.mxu0 0.0
  %1033 = vmatpush.msra.mxu0 0.0
  %1034 = vmatpush.msra.mxu0 0.0
  %1035 = vmatpush.msra.mxu0 0.0
  %1036 = vmatpush.msra.mxu0 0.0
  %1037 = vmatpush.msra.mxu0 0.0
  %1038 = vmatpush.msra.mxu0 0.0
  %1039 = vmatpush.msra.mxu0 0.0
  %1040 = vmatpush.msra.mxu0 0.0
  %1041 = vmatpush.msra.mxu0 0.0
  %1042 = vmatpush.msra.mxu0 %v1021
  %1043 = vmatmul.f32.gmra.mxu0 %v1025
  %v1044 = vpop.f32.mrf.mxu0
  %v1045 = vadd.f32 %v962, %v1044
  %1046 = vdwg.mxu0
  %v1047 = vadd.f32 %v14, %v1045
  %v1048 = vrot.slane %v1047, 4
  %v1049 = vadd.f32 %v1047, %v1048
  %v1050 = vrot.slane %v1049, 2
  %v1051 = vadd.f32 %v1049, %v1050
  %v1052 = vrot.slane %v1051, 1
  %v1053 = vadd.f32 %v1051, %v1052
  %v1054 = vrcp.pop 8.0
  %v1055 = vmul.f32 8.0, %v1054
  %v1056 = vsub.f32 1.0, %v1055
  %v1057 = vmul.f32 %v1054, %v1056
  %v1058 = vadd.f32 %v1054, %v1057
  %vm1059 = vweird.f32 %v1054
  %v1060 = vsel %vm1059, %v1054, %v1058
  %v1061 = vmul.f32 %v1053, %v1060
  %v1062 = vsub.f32 %v1047, %v1061
  %v1063 = vmul.f32 %v1062, %v1062
  %v1064 = vrot.slane %v1063, 4
  %v1065 = vadd.f32 %v1063, %v1064
  %v1066 = vrot.slane %v1065, 2
  %v1067 = vadd.f32 %v1065, %v1066
  %v1068 = vrot.slane %v1067, 1
  %v1069 = vadd.f32 %v1067, %v1068
  %v1070 = vmul.f32 %v1069, %v1060
  %v1071 = vadd.f32 %v1070, 1e-05
  %v1072 = vrsqrt.pop %v1071
  %v1073 = vmul.f32 %v1072, %v1071
  %v1074 = vmul.f32 %v1073, %v1072
  %v1075 = vmul.f32 0.5, %v1074
  %v1076 = vsub.f32 1.5, %v1075
  %v1077 = vmul.f32 %v1072, %v1076
  %vm1078 = vweird.f32 %v1071
  %vm1079 = vweird.f32 %v1072
  %vm1080 = vmor %vm1078, %vm1079
  %v1081 = vsel %vm1080, %v1072, %v1077
  %v1082 = vmul.f32 %v1062, %v1081
  %1083 = vset.pattern.permute.xlu0 34
  %1084 = vperm.xlu0 %1083, %v958
  %v1085 = vpop.permute.xlu0 %1084
  %v1087 = vmul.f32 %v1082, %v1085
  %1088 = vset.pattern.permute.xlu0 35
  %1089 = vperm.xlu0 %1088, %v958
  %v1090 = vpop.permute.xlu0 %1089
  %v1092 = vadd.f32 %v1087, %v1090
  %1095 = vrot.lane.b32.xlu0 %v18, 96
  %v1096 = vpop.permute.xlu0 %1095
  %1097 = vrot.lane.b32.xlu0 %v19, 96
  %v1098 = vpop.permute.xlu0 %1097
  %1101 = vxpose.xlu0.b32.start [1/16] %v1096, 128
  %1102 = vxpose.xlu0.b32.cont [2/16] %v1098, 128
  %1103 = vxpose.xlu0.b32.cont [3/16] 0.0, 128
  %1104 = vxpose.xlu0.b32.cont [4/16] 0.0, 128
  %1105 = vxpose.xlu0.b32.cont [5/16] 0.0, 128
  %1106 = vxpose.xlu0.b32.cont [6/16] 0.0, 128
  %1107 = vxpose.xlu0.b32.cont [7/16] 0.0, 128
  %1108 = vxpose.xlu0.b32.cont [8/16] 0.0, 128
  %1109 = vxpose.xlu0.b32.cont [9/16] 0.0, 128
  %1110 = vxpose.xlu0.b32.cont [10/16] 0.0, 128
  %1111 = vxpose.xlu0.b32.cont [11/16] 0.0, 128
  %1112 = vxpose.xlu0.b32.cont [12/16] 0.0, 128
  %1113 = vxpose.xlu0.b32.cont [13/16] 0.0, 128
  %1114 = vxpose.xlu0.b32.cont [14/16] 0.0, 128
  %1115 = vxpose.xlu0.b32.cont [15/16] 0.0, 128
  %1116 = vxpose.xlu0.b32.end [16/16] 0.0, 128
  %v1117 = vpop.trf.xlu0
  %v1118 = vpop.trf.xlu0
  %v1119 = vpop.trf.xlu0
  %v1120 = vpop.trf.xlu0
  %v1121 = vpop.trf.xlu0
  %v1122 = vpop.trf.xlu0
  %v1123 = vpop.trf.xlu0
  %v1124 = vpop.trf.xlu0
  %v1125 = vpop.trf.xlu0
  %v1126 = vpop.trf.xlu0
  %v1127 = vpop.trf.xlu0
  %v1128 = vpop.trf.xlu0
  %v1129 = vpop.trf.xlu0
  %v1130 = vpop.trf.xlu0
  %v1131 = vpop.trf.xlu0
  %v1132 = vpop.trf.xlu0
  %v1134 = vsel %vm52, %v1117, 0
  %v1137 = vsel %vm52, %v1118, 0
  %v1140 = vsel %vm52, %v1119, 0
  %v1143 = vsel %vm52, %v1120, 0
  %v1146 = vsel %vm52, %v1121, 0
  %v1149 = vsel %vm52, %v1122, 0
  %v1152 = vsel %vm52, %v1123, 0
  %v1155 = vsel %vm52, %v1124, 0
  %v1158 = vsel %vm62, 1.0, 0
  %1160 = vmatpush.msra.mxu0 0.0
  %1161 = vmatpush.msra.mxu0 0.0
  %1162 = vmatpush.msra.mxu0 0.0
  %1163 = vmatpush.msra.mxu0 0.0
  %1164 = vmatpush.msra.mxu0 0.0
  %1165 = vmatpush.msra.mxu0 0.0
  %1166 = vmatpush.msra.mxu0 0.0
  %1167 = vmatpush.msra.mxu0 0.0
  %1168 = vmatpush.msra.mxu0 0.0
  %1169 = vmatpush.msra.mxu0 0.0
  %1170 = vmatpush.msra.mxu0 0.0
  %1171 = vmatpush.msra.mxu0 0.0
  %1172 = vmatpush.msra.mxu0 0.0
  %1173 = vmatpush.msra.mxu0 0.0
  %1174 = vmatpush.msra.mxu0 %v1158
  %1175 = vmatpush.msra.mxu0 %v1092
  %1176 = vmatmul.f32.gmra.mxu0 %v1134
  %v1177 = vpop.f32.mrf.mxu0
  %v1178 = vadd.f32 0.0, %v1177
  %1179 = vmatmul.f32.gmra.mxu0 %v1137
  %v1180 = vpop.f32.mrf.mxu0
  %v1181 = vadd.f32 0.0, %v1180
  %1182 = vmatmul.f32.gmra.mxu0 %v1140
  %v1183 = vpop.f32.mrf.mxu0
  %v1184 = vadd.f32 0.0, %v1183
  %1185 = vmatmul.f32.gmra.mxu0 %v1143
  %v1186 = vpop.f32.mrf.mxu0
  %v1187 = vadd.f32 0.0, %v1186
  %1188 = vmatmul.f32.gmra.mxu0 %v1146
  %v1189 = vpop.f32.mrf.mxu0
  %v1190 = vadd.f32 0.0, %v1189
  %1191 = vmatmul.f32.gmra.mxu0 %v1149
  %v1192 = vpop.f32.mrf.mxu0
  %v1193 = vadd.f32 0.0, %v1192
  %1194 = vmatmul.f32.gmra.mxu0 %v1152
  %v1195 = vpop.f32.mrf.mxu0
  %v1196 = vadd.f32 0.0, %v1195
  %1197 = vmatmul.f32.gmra.mxu0 %v1155
  %v1198 = vpop.f32.mrf.mxu0
  %v1199 = vadd.f32 0.0, %v1198
  %1200 = vdwg.mxu0
  %v1201 = vmax.f32 %v1178, 0.0
  %v1202 = vmax.f32 %v1181, 0.0
  %v1203 = vmax.f32 %v1184, 0.0
  %v1204 = vmax.f32 %v1187, 0.0
  %v1205 = vmax.f32 %v1190, 0.0
  %v1206 = vmax.f32 %v1193, 0.0
  %v1207 = vmax.f32 %v1196, 0.0
  %v1208 = vmax.f32 %v1199, 0.0
  %v1209 = vld [vmem:[%s1] sm:$0xff]
  %v1210 = vld [vmem:[%s1 + $0x8] sm:$0xff]
  %1211 = vset.pattern.permute.xlu0 33
  %1212 = vperm.xlu0 %1211, %v958
  %v1213 = vpop.permute.xlu0 %1212
  %1217 = vrot.lane.b32.xlu0 %v1209, 32
  %v1218 = vpop.permute.xlu0 %1217
  %1219 = vrot.lane.b32.xlu0 %v1210, 32
  %v1220 = vpop.permute.xlu0 %1219
  %vm1221 = vcmask 261120
  %v1222 = vsel %vm1221, %v1218, %v1220
  %v1223 = vsel %vm524, %v1222, 0
  %1225 = vmatpush.msra.mxu0 0.0
  %1226 = vmatpush.msra.mxu0 0.0
  %1227 = vmatpush.msra.mxu0 0.0
  %1228 = vmatpush.msra.mxu0 0.0
  %1229 = vmatpush.msra.mxu0 0.0
  %1230 = vmatpush.msra.mxu0 0.0
  %1231 = vmatpush.msra.mxu0 0.0
  %1232 = vmatpush.msra.mxu0 0.0
  %1233 = vmatpush.msra.mxu0 %v1208
  %1234 = vmatpush.msra.mxu0 %v1207
  %1235 = vmatpush.msra.mxu0 %v1206
  %1236 = vmatpush.msra.mxu0 %v1205
  %1237 = vmatpush.msra.mxu0 %v1204
  %1238 = vmatpush.msra.mxu0 %v1203
  %1239 = vmatpush.msra.mxu0 %v1202
  %1240 = vmatpush.msra.mxu0 %v1201
  %1241 = vmatmul.f32.gmra.mxu0 %v1223
  %v1242 = vpop.f32.mrf.mxu0
  %v1243 = vadd.f32 %v1213, %v1242
  %1244 = vdwg.mxu0
  %v1245 = vadd.f32 %v1092, %v1243
  %v1246 = vrot.slane %v1245, 4
  %v1247 = vadd.f32 %v1245, %v1246
  %v1248 = vrot.slane %v1247, 2
  %v1249 = vadd.f32 %v1247, %v1248
  %v1250 = vrot.slane %v1249, 1
  %v1251 = vadd.f32 %v1249, %v1250
  %v1252 = vmul.f32 %v1251, %v1060
  %v1253 = vsub.f32 %v1245, %v1252
  %v1254 = vmul.f32 %v1253, %v1253
  %v1255 = vrot.slane %v1254, 4
  %v1256 = vadd.f32 %v1254, %v1255
  %v1257 = vrot.slane %v1256, 2
  %v1258 = vadd.f32 %v1256, %v1257
  %v1259 = vrot.slane %v1258, 1
  %v1260 = vadd.f32 %v1258, %v1259
  %v1261 = vmul.f32 %v1260, %v1060
  %v1262 = vadd.f32 %v1261, 1e-05
  %v1263 = vrsqrt.pop %v1262
  %v1264 = vmul.f32 %v1263, %v1262
  %v1265 = vmul.f32 %v1264, %v1263
  %v1266 = vmul.f32 0.5, %v1265
  %v1267 = vsub.f32 1.5, %v1266
  %v1268 = vmul.f32 %v1263, %v1267
  %vm1269 = vweird.f32 %v1262
  %vm1270 = vweird.f32 %v1263
  %vm1271 = vmor %vm1269, %vm1270
  %v1272 = vsel %vm1271, %v1263, %v1268
  %v1273 = vmul.f32 %v1253, %v1272
  %1274 = vset.pattern.permute.xlu0 36
  %1275 = vperm.xlu0 %1274, %v958
  %v1276 = vpop.permute.xlu0 %1275
  %v1278 = vmul.f32 %v1273, %v1276
  %1279 = vset.pattern.permute.xlu0 37
  %1280 = vperm.xlu0 %1279, %v958
  %v1281 = vpop.permute.xlu0 %1280
  %v1283 = vadd.f32 %v1278, %v1281
  %1284 = vst [vmem:[%s3] sm:$0xff] %v1283
  // Predicated region
  $region14: #{cross_attention_pallas.1} parent=0 // pred_check
    _
  $region15: #{cross_attention_pallas.1} parent=0 // pred_check_branch
    %1286 = sbr.rel (0) target = $region17
  $region16: #{cross_attention_pallas.1} parent=0 // pred_region
    _
  $region17: #{cross_attention_pallas.1} parent=0 // pred_fallthru
    _
  // Predicated region
  $region18: #{cross_attention_pallas.1} parent=0 // pred_check
    _
  $region19: #{cross_attention_pallas.1} parent=0 // pred_check_branch
    %1288 = sbr.rel (0) target = $region21
  $region20: #{cross_attention_pallas.1} parent=0 // pred_region
    _
  $region21: #{cross_attention_pallas.1} parent=0 // pred_fallthru
    _

</llo_original>
